<compile_context>
chip_gen: v7x
topology: tpu7x:2x2x1
jax: 0.10.0
libtpu: 0.0.40
codegen_flags: <defaults>
</compile_context>

<pallas_src>
import math
import functools

import jax
import jax.numpy as jnp
from jax.experimental import pallas as pl
from jax.experimental.pallas import tpu as pltpu


# ----------------------------------------------------------------------------
# Parameter setup (mirrors GaussianSmoothing.__init__, dim=2).
# Returns the full 2D depthwise weight (for the reference conv) and the
# normalized 1D separable factors used by the Pallas kernel.  By construction
# the module's 2D kernel is outer(g_h, g_w)/sum == outer(g_h/sum, g_w/sum).
# ----------------------------------------------------------------------------
def make_gaussian_weights(channels, kernel_size, sigma, dim=2):
    if isinstance(kernel_size, (int, float)):
        kernel_size = [int(kernel_size)] * dim
    if isinstance(sigma, (int, float)):
        sigma = [float(sigma)] * dim
    assert dim == 2

    gs = []
    for size, std in zip(kernel_size, sigma):
        mean = (size - 1) / 2.0
        grid1d = jnp.arange(size, dtype=jnp.float32)
        g = (1.0 / (std * math.sqrt(2.0 * math.pi))) * jnp.exp(
            -(((grid1d - mean) / std) ** 2) / 2.0
        )
        gs.append(g)

    # Full 2D kernel, exactly as the module builds it (for the reference check).
    kernel2d = gs[0][:, None] * gs[1][None, :]
    kernel2d = kernel2d / jnp.sum(kernel2d)
    weight2d = jnp.tile(kernel2d[None, None], (channels, 1, 1, 1)).astype(jnp.float32)

    # Normalized separable factors (identical filter up to f32 rounding).
    w_h = (gs[0] / jnp.sum(gs[0])).astype(jnp.float32)
    w_w = (gs[1] / jnp.sum(gs[1])).astype(jnp.float32)
    return weight2d, w_h, w_w


# ----------------------------------------------------------------------------
# Pallas kernel: one (BC, H, W) block of channel planes per grid step.
#   w_ref : SMEM (KH + KW,) f32  -- [w_h..., w_w...], shared by all channels
#   x_ref : VMEM (BC, H, W)      -- H on sublanes, W on lanes
#   o_ref : VMEM (BC, Ho, Wo)
# Separable Gaussian with symmetric-tap pairing; f32 cast hoisted out of the
# tap loops; no explicit tmp store (row-pass result stays a value).
# ----------------------------------------------------------------------------
def _gauss2d_kernel(w_ref, x_ref, o_ref, *, KH, KW, Ho, Wo):
    xf = x_ref[...].astype(jnp.float32)          # single cast per block

    # Row (W / lane) pass: row[:, :, j] = sum_kw w_w[kw] * x[:, :, j + kw]
    row = None
    for k in range(KW // 2):
        pair = xf[:, :, k:k + Wo] + xf[:, :, KW - 1 - k:KW - 1 - k + Wo]
        term = w_ref[KH + k] * pair               # w_w[k] == w_w[KW-1-k]
        row = term if row is None else row + term
    if KW % 2 == 1:
        c = KW // 2
        term = w_ref[KH + c] * xf[:, :, c:c + Wo]
        row = term if row is None else row + term

    # Column (H / sublane) pass: o[:, i, :] = sum_kh w_h[kh] * row[:, i + kh, :]
    out = None
    for k in range(KH // 2):
        pair = row[:, k:k + Ho, :] + row[:, KH - 1 - k:KH - 1 - k + Ho, :]
        term = w_ref[k] * pair                    # w_h[k] == w_h[KH-1-k]
        out = term if out is None else out + term
    if KH % 2 == 1:
        c = KH // 2
        term = w_ref[c] * row[:, c:c + Ho, :]
        out = term if out is None else out + term

    o_ref[...] = out.astype(o_ref.dtype)


def _vmem_limit_bytes():
    """Generation-aware scoped-VMEM limit: ~75% of the chip's VMEM."""
    try:
        cap = int(pltpu.get_tpu_info().vmem_capacity_bytes)
    except Exception:
        cap = 64 * 2 ** 20          # safe fallback (v7x-sized)
    return max(32 * 2 ** 20, (cap * 3) // 4)


def gaussian_smoothing(x, w_h, w_w):
    """Depthwise 'valid' Gaussian smoothing.

    x   : (N, C, H, W)
    w_h : (KH,) normalized vertical Gaussian factor (shared across channels)
    w_w : (KW,) normalized horizontal Gaussian factor
    returns (N, C, H-KH+1, W-KW+1), same dtype as x.
    """
    N, C, H, W = x.shape
    KH, KW = int(w_h.shape[0]), int(w_w.shape[0])
    Ho, Wo = H - KH + 1, W - KW + 1
    assert Ho >= 1 and Wo >= 1, "input spatial dims must be >= kernel size"
    NC = N * C

    # Free relayout: merge leading dims only (no transpose, no pad).
    x_nc = x.reshape(NC, H, W)

    vmem_limit = _vmem_limit_bytes()

    # Channels per grid step: keep the f32 working set per step to a modest
    # slice of VMEM, and keep at least ~4 grid steps (pipelining + megacore).
    plane_f32_bytes = H * W * 4
    bc_by_vmem = max(1, (vmem_limit // 16) // plane_f32_bytes)
    bc_cap = max(1, min(bc_by_vmem, pl.cdiv(NC, 4), NC))
    BC = 1
    for d in range(int(bc_cap), 0, -1):           # largest divisor of NC <= cap
        if NC % d == 0:
            BC = d
            break

    # Shared 1D weight table in SMEM: [w_h (KH), w_w (KW)].
    w_all = jnp.concatenate([w_h.astype(jnp.float32), w_w.astype(jnp.float32)])

    kernel = functools.partial(_gauss2d_kernel, KH=KH, KW=KW, Ho=Ho, Wo=Wo)

    out = pl.pallas_call(
        kernel,
        out_shape=jax.ShapeDtypeStruct((NC, Ho, Wo), x.dtype),
        grid_spec=pltpu.PrefetchScalarGridSpec(
            num_scalar_prefetch=0,
            grid=(NC // BC,),
            in_specs=[
                # tiny shared weight vector in SMEM
                pl.BlockSpec(memory_space=pltpu.MemorySpace.SMEM),
                # BC full (H, W) planes per grid step; W on lanes
                pl.BlockSpec((BC, H, W), lambda c: (c, 0, 0)),
            ],
            out_specs=pl.BlockSpec((BC, Ho, Wo), lambda c: (c, 0, 0)),
        ),
        compiler_params=pltpu.CompilerParams(
            dimension_semantics=("parallel",),
            vmem_limit_bytes=int(vmem_limit),
        ),
    )(w_all, x_nc)

    return out.reshape(N, C, Ho, Wo)


if __name__ == "__main__":
    key1, key2 = jax.random.split(jax.random.PRNGKey(0))

    # ---- Test 1: module-default style usage -------------------------------
    N, C, H, W = 2, 4, 16, 16
    kernel_size, sigma = 3, 1.5
    x = jax.random.normal(key1, (N, C, H, W), dtype=jnp.float32)

    weight2d, w_h, w_w = make_gaussian_weights(C, kernel_size, sigma, dim=2)
    out = jax.block_until_ready(gaussian_smoothing(x, w_h, w_w))

    ref = jax.lax.conv_general_dilated(
        x, weight2d, window_strides=(1, 1), padding="VALID",
        dimension_numbers=("NCHW", "OIHW", "NCHW"), feature_group_count=C)
    assert out.shape == (N, C, H - kernel_size + 1, W - kernel_size + 1)
    assert jnp.allclose(out, ref, atol=1e-5, rtol=1e-5)

    # ---- Test 2: anisotropic kernel, odd channel count (BC=1 path) --------
    N2, C2, H2, W2 = 1, 3, 12, 20
    ks2, sg2 = [3, 5], [1.0, 2.0]
    x2 = jax.random.normal(key2, (N2, C2, H2, W2), dtype=jnp.float32)

    weight2d2, w_h2, w_w2 = make_gaussian_weights(C2, ks2, sg2, dim=2)
    out2 = jax.block_until_ready(gaussian_smoothing(x2, w_h2, w_w2))

    ref2 = jax.lax.conv_general_dilated(
        x2, weight2d2, window_strides=(1, 1), padding="VALID",
        dimension_numbers=("NCHW", "OIHW", "NCHW"), feature_group_count=C2)
    assert out2.shape == (N2, C2, H2 - ks2[0] + 1, W2 - ks2[1] + 1)
    assert jnp.allclose(out2, ref2, atol=1e-5, rtol=1e-5)

    print("KERNEL_OK")
</pallas_src>

<mosaic_0001>
module attributes {stable_mosaic.version = 11 : i64} {
  func.func @_gauss2d_kernel(%arg0: i32, %arg1: memref<6xf32, #tpu.memory_space<smem>>, %arg2: memref<2x16x16xf32, #tpu.memory_space<vmem>>, %arg3: memref<2x14x14xf32, #tpu.memory_space<vmem>>) attributes {dimension_semantics = [#tpu.dimension_semantics<parallel>], iteration_bounds = array<i64: 4>, scalar_prefetch = 0 : i64, scratch_operands = 0 : i64, tpu.core_type = #tpu.core_type<tc>, window_params = [{transform_indices = @transform_0, window_bounds = array<i64: 6>}, {transform_indices = @transform_1, window_bounds = array<i64: 2, 16, 16>}, {transform_indices = @transform_2, window_bounds = array<i64: 2, 14, 14>}]} {
    %c0 = arith.constant 0 : index
    %c0_0 = arith.constant 0 : index
    %c0_1 = arith.constant 0 : index
    %0 = vector.load %arg2[%c0, %c0_0, %c0_1] : memref<2x16x16xf32, #tpu.memory_space<vmem>>, vector<2x16x16xf32>
    %1 = vector.extract_strided_slice %0 {offsets = [0, 0, 0], sizes = [2, 16, 14], strides = [1, 1, 1]} : vector<2x16x16xf32> to vector<2x16x14xf32>
    %2 = vector.extract_strided_slice %0 {offsets = [0, 0, 2], sizes = [2, 16, 14], strides = [1, 1, 1]} : vector<2x16x16xf32> to vector<2x16x14xf32>
    %3 = arith.addf %1, %2 : vector<2x16x14xf32>
    %c3 = arith.constant 3 : index
    %4 = memref.load %arg1[%c3] : memref<6xf32, #tpu.memory_space<smem>>
    %5 = vector.broadcast %4 : f32 to vector<2x16x14xf32>
    %6 = arith.mulf %5, %3 : vector<2x16x14xf32>
    %c4 = arith.constant 4 : index
    %7 = memref.load %arg1[%c4] : memref<6xf32, #tpu.memory_space<smem>>
    %8 = vector.extract_strided_slice %0 {offsets = [0, 0, 1], sizes = [2, 16, 14], strides = [1, 1, 1]} : vector<2x16x16xf32> to vector<2x16x14xf32>
    %9 = vector.broadcast %7 : f32 to vector<2x16x14xf32>
    %10 = arith.mulf %9, %8 : vector<2x16x14xf32>
    %11 = arith.addf %6, %10 : vector<2x16x14xf32>
    %12 = vector.extract_strided_slice %11 {offsets = [0, 0, 0], sizes = [2, 14, 14], strides = [1, 1, 1]} : vector<2x16x14xf32> to vector<2x14x14xf32>
    %13 = vector.extract_strided_slice %11 {offsets = [0, 2, 0], sizes = [2, 14, 14], strides = [1, 1, 1]} : vector<2x16x14xf32> to vector<2x14x14xf32>
    %14 = arith.addf %12, %13 : vector<2x14x14xf32>
    %c0_2 = arith.constant 0 : index
    %15 = memref.load %arg1[%c0_2] : memref<6xf32, #tpu.memory_space<smem>>
    %16 = vector.broadcast %15 : f32 to vector<2x14x14xf32>
    %17 = arith.mulf %16, %14 : vector<2x14x14xf32>
    %c1 = arith.constant 1 : index
    %18 = memref.load %arg1[%c1] : memref<6xf32, #tpu.memory_space<smem>>
    %19 = vector.extract_strided_slice %11 {offsets = [0, 1, 0], sizes = [2, 14, 14], strides = [1, 1, 1]} : vector<2x16x14xf32> to vector<2x14x14xf32>
    %20 = vector.broadcast %18 : f32 to vector<2x14x14xf32>
    %21 = arith.mulf %20, %19 : vector<2x14x14xf32>
    %22 = arith.addf %17, %21 : vector<2x14x14xf32>
    %c0_3 = arith.constant 0 : index
    %c0_4 = arith.constant 0 : index
    %c0_5 = arith.constant 0 : index
    %23 = vector.load %arg3[%c0_3, %c0_4, %c0_5] : memref<2x14x14xf32, #tpu.memory_space<vmem>>, vector<2x14x14xf32>
    tpu.vector_store %arg3[%c0_3, %c0_4, %c0_5], %22 {strides = array<i32>} : memref<2x14x14xf32, #tpu.memory_space<vmem>>, vector<2x14x14xf32>,
    return
  }
  func.func @transform_0(%arg0: i32) -> i32 {
    %c0_i32 = arith.constant 0 : i32
    %c0_i32_0 = arith.constant 0 : i32
    return %c0_i32 : i32
  }
  func.func @transform_1(%arg0: i32) -> (i32, i32, i32) {
    %c0_i32 = arith.constant 0 : i32
    %c0_i32_0 = arith.constant 0 : i32
    %c0_i32_1 = arith.constant 0 : i32
    return %arg0, %c0_i32, %c0_i32_0 : i32, i32, i32
  }
  func.func @transform_2(%arg0: i32) -> (i32, i32, i32) {
    %c0_i32 = arith.constant 0 : i32
    %c0_i32_0 = arith.constant 0 : i32
    %c0_i32_1 = arith.constant 0 : i32
    return %arg0, %c0_i32, %c0_i32_0 : i32, i32, i32
  }
}

</mosaic_0001>

<llo_original>
// kernel: tpu_custom_call.1
$region0: #{tpu_custom_call.1}
  #allocation0 [shape = 'u32[]', space=smem, size = 0x4, offset = 0x4, fixed_abs, tag = 'smem constant byte address 0x4 - core index']
  #allocation1 [shape = 'u32[144,128]{1,0:T(1,128)}', space=vmem, size = 0x12000, scoped, tag = 'internal scratch']
  %s0 = inlined_call_operand.hbm [shape: f32[6], index: 0, kind: input, shape index: {}]
  %s1 = inlined_call_operand.hbm [shape: f32[8,16,16], index: 1, kind: input, shape index: {}]
  %s2 = inlined_call_operand.vmem [shape: f32[8,14,14], index: 2, kind: output, shape index: {}]
  %s3 = sld [smem:[#allocation0]]
  $region49: #{tpu_custom_call.1} parent=0
    _
  %s5 = ssub.s32 1, %s3
  %s6 = scalar_select 0, %s5, %s3
  $region1: #{tpu_custom_call.1} parent=0
    #allocation2 [shape = 'u8[512]{0}', space=smem, size = 0x200, scoped, tag = 'input window, operand 0, single buffered']
    #allocation3 [shape = 's32[2]{0}', space=sflag, size = 0x8, scoped, tag = 'scoped memory for tpu_custom_call.1']
    #allocation4 [shape = 's32[2]{0}', space=sflag, size = 0x8, scoped, tag = 'scoped memory for tpu_custom_call.1']
    #allocation5 [shape = 'u8[32768]{0}', space=vmem, size = 0x8000, scoped, tag = 'input window, operand 1']
    %7 = vsyncpa [#allocation4], 0
    %8 = vsyncpa [#allocation3], 0
    %s9 = scalar_lea.sflag [#allocation3], 1
    %10 = vsyncpa %s9, 0
    loop: start=0, step=1, limit=6
    $region2: #{tpu_custom_call.1} parent=1 // loop_pre_header
      _
    $region3: #{tpu_custom_call.1} parent=1 // loop_header
      %s12 = sphi 0, %s16
      %p13 = scmp.ge.s32.totalorder %s12, 6
      %s20 = sphi 0, %s20
      %s22 = sphi 0, %s20
      %s23 = sphi 0, %s22
      %s37 = sphi 0, %s23
      %s43 = sphi 0, %s45
      %s46 = sphi 0, %s43
      %s47 = sphi 0, %s46
      %s63 = sphi 0, %s47
      %s69 = sphi 0, %s71
      %s72 = sphi 0, %s69
      %s73 = sphi 0, %s72
      %s89 = sphi 0, %s73
    $region4: #{tpu_custom_call.1} parent=1 // loop_header_branch
      %15 = sbr.rel (%p13) target = $region8
    $region5: #{tpu_custom_call.1} parent=1 // loop_body
      %s17 = ssub.s32 %s12, 1
      %s18 = ssub.s32 %s12, 2
      %s19 = sadd.s32 %s12, 1
      %s21 = sadd.s32 %s20, 1
      %p24 = scmp.eq.s32.totalorder %s12, 3
      %p25 = scmp.ne.s32.totalorder %s20, %s22
      %p26 = scmp.eq.s32.totalorder %s12, 0
      %p27 = por %p25, %p26
      %p28 = scmp.ne.s32.totalorder %s20, %s22
      %p29 = scmp.eq.s32.totalorder %s17, 3
      %p30 = por %p28, %p29
      %p31 = scmp.ne.s32.totalorder %s22, %s23
      %p32 = scmp.eq.s32.totalorder %s17, 0
      %p33 = por %p31, %p32
      %p34 = scmp.ne.s32.totalorder %s22, %s23
      %p35 = scmp.eq.s32.totalorder %s18, 3
      %p36 = por %p34, %p35
      %p38 = scmp.ne.s32.totalorder %s23, %s37
      %p39 = scmp.eq.s32.totalorder %s18, 0
      %p40 = por %p38, %p39
      %s41 = ssub.s32 %s12, %s19
      %p42 = scmp.eq.s32.totalorder %s41, 0
      %s44 = sadd.s32 %s43, 1
      %s45 = scalar_select %p42, %s43, %s44
      %p48 = pneg %p42
      %p49 = scmp.eq.s32.totalorder %s12, 3
      %p50 = por %p48, %p49
      %p51 = scmp.ne.s32.totalorder %s43, %s46
      %p52 = scmp.eq.s32.totalorder %s12, 0
      %p53 = por %p51, %p52
      %p54 = scmp.ne.s32.totalorder %s43, %s46
      %p55 = scmp.eq.s32.totalorder %s17, 3
      %p56 = por %p54, %p55
      %p57 = scmp.ne.s32.totalorder %s46, %s47
      %p58 = scmp.eq.s32.totalorder %s17, 0
      %p59 = por %p57, %p58
      %p60 = scmp.ne.s32.totalorder %s46, %s47
      %p61 = scmp.eq.s32.totalorder %s18, 3
      %p62 = por %p60, %p61
      %p64 = scmp.ne.s32.totalorder %s47, %s63
      %p65 = scmp.eq.s32.totalorder %s18, 0
      %p66 = por %p64, %p65
      %s67 = ssub.s32 %s12, %s19
      %p68 = scmp.eq.s32.totalorder %s67, 0
      %s70 = sadd.s32 %s69, 1
      %s71 = scalar_select %p68, %s69, %s70
      %p74 = pneg %p68
      %p75 = scmp.eq.s32.totalorder %s12, 3
      %p76 = por %p74, %p75
      %p77 = scmp.ne.s32.totalorder %s69, %s72
      %p78 = scmp.eq.s32.totalorder %s12, 0
      %p79 = por %p77, %p78
      %p80 = scmp.ne.s32.totalorder %s69, %s72
      %p81 = scmp.eq.s32.totalorder %s17, 3
      %p82 = por %p80, %p81
      %p83 = scmp.ne.s32.totalorder %s72, %s73
      %p84 = scmp.eq.s32.totalorder %s17, 0
      %p85 = por %p83, %p84
      %p86 = scmp.ne.s32.totalorder %s72, %s73
      %p87 = scmp.eq.s32.totalorder %s18, 3
      %p88 = por %p86, %p87
      %p90 = scmp.ne.s32.totalorder %s73, %s89
      %p91 = scmp.eq.s32.totalorder %s18, 0
      %p92 = por %p90, %p91
      %p93 = scmp.le.s32.totalorder 1, %s12
      %p94 = scmp.lt.s32.totalorder %s12, 5
      %p95 = pnand %p93, %p94
      %p96 = pneg %p95
      // Predicated region
      $region9: #{tpu_custom_call.1} parent=5 // pred_check
        _
      $region10: #{tpu_custom_call.1} parent=5 // pred_check_branch
        %98 = sbr.rel (%p95) target = $region12
      $region11: #{tpu_custom_call.1} parent=5 // pred_region
        %s99 = ssub.s32 %s12, 1
        // Predicated region
        $region13: #{tpu_custom_call.1} parent=11 // pred_check
          %p100 = pneg %p33
        $region14: #{tpu_custom_call.1} parent=11 // pred_check_branch
          %102 = sbr.rel (%p100) target = $region16
        $region15: #{tpu_custom_call.1} parent=11 // pred_region
          %s104 = ssub.s32 16, 16
          %105 = vsyncadd [#allocation4], %s104
          %108 = dma.hbm_to_smem %s0, 16, [#allocation2], [#allocation4]
        $region16: #{tpu_custom_call.1} parent=11 // pred_fallthru
          _
      $region12: #{tpu_custom_call.1} parent=5 // pred_fallthru
        _
      %p109 = scmp.lt.s32.totalorder %s12, 4
      // Predicated region
      $region17: #{tpu_custom_call.1} parent=5 // pred_check
        %p110 = pneg %p109
      $region18: #{tpu_custom_call.1} parent=5 // pred_check_branch
        %112 = sbr.rel (%p110) target = $region20
      $region19: #{tpu_custom_call.1} parent=5 // pred_region
        // Predicated region
        $region21: #{tpu_custom_call.1} parent=19 // pred_check
          %p113 = pneg %p53
        $region22: #{tpu_custom_call.1} parent=19 // pred_check_branch
          %115 = sbr.rel (%p113) target = $region24
        $region23: #{tpu_custom_call.1} parent=19 // pred_region
          %s116 = sand.u32 %s43, 1
          %s117 = scalar_lea.sflag [#allocation3], %s116
          %s118 = sand.u32 %s43, 1
          %s119 = smul.addr %s118, 32
          %s120 = scalar_lea.vmem [#allocation5], %s119
          %s121 = smul.u32 2, %s12
          %s123 = ssub.s32 512, 512
          %124 = vsyncadd %s117, %s123
          %s125 = smul.addr %s121, 2
          %s126 = smul.addr %s125, 128
          %s127 = scalar_lea.hbm %s1, %s126
          %s128 = sshll.u32 %s120, 4
          %s129 = int_to_ptr.vmem [resolvable:$true] %s128
          %134 = dma.hbm_to_vmem [thread:$0]  %s127, 512, %s129, %s117, 128, 128, 8
        $region24: #{tpu_custom_call.1} parent=19 // pred_fallthru
          _
      $region20: #{tpu_custom_call.1} parent=5 // pred_fallthru
        _
      %p135 = scmp.le.s32.totalorder 1, %s12
      %p136 = scmp.lt.s32.totalorder %s12, 5
      %p137 = pnand %p135, %p136
      %p138 = pneg %p137
      // Predicated region
      $region25: #{tpu_custom_call.1} parent=5 // pred_check
        _
      $region26: #{tpu_custom_call.1} parent=5 // pred_check_branch
        %140 = sbr.rel (%p137) target = $region28
      $region27: #{tpu_custom_call.1} parent=5 // pred_region
        %s141 = ssub.s32 %s12, 1
        // Predicated region
        $region29: #{tpu_custom_call.1} parent=27 // pred_check
          %p142 = pneg %p33
        $region30: #{tpu_custom_call.1} parent=27 // pred_check_branch
          %144 = sbr.rel (%p142) target = $region32
        $region31: #{tpu_custom_call.1} parent=27 // pred_region
          %145 = dma.done [#allocation4], 16
        $region32: #{tpu_custom_call.1} parent=27 // pred_fallthru
          _
        %s146 = sand.u32 %s46, 1
        %s147 = scalar_lea.sflag [#allocation3], %s146
        %s148 = sand.u32 %s46, 1
        %s149 = smul.addr %s148, 32
        %s150 = scalar_lea.vmem [#allocation5], %s149
        // Predicated region
        $region33: #{tpu_custom_call.1} parent=27 // pred_check
          %p151 = pneg %p59
        $region34: #{tpu_custom_call.1} parent=27 // pred_check_branch
          %153 = sbr.rel (%p151) target = $region36
        $region35: #{tpu_custom_call.1} parent=27 // pred_region
          %154 = dma.done %s147, 512
        $region36: #{tpu_custom_call.1} parent=27 // pred_fallthru
          _
        %155 = sfence
        %p156 = pneg %p33
        %p157 = pneg %p30
        %s158 = sand.u32 %s46, 1
        %s159 = scalar_lea.sflag [#allocation3], %s158
        %s160 = sand.u32 %s46, 1
        %s161 = smul.addr %s160, 32
        %s162 = scalar_lea.vmem [#allocation5], %s161
        %p163 = pneg %p59
        %p164 = pneg %p56
        %p165 = pneg %p85
        %p166 = pneg %p82
        %s167 = smul.u32 2, %s17
        %p168 = scmp.lt.s32.totalorder %s167, 7
        %s169 = scalar_select %p168, %s167, 7
        %s170 = smul.addr %s169, 2
        %s171 = smul.addr %s170, 8
        %s172 = scalar_lea.vmem %s2, %s171
        %s173 = smul.u32 2, %s17
        %s174 = smul.u32 2, %s17
        %p175 = scmp.lt.s32.totalorder %s174, 7
        %s176 = scalar_select %p175, %s174, 7
        %s177 = smul.addr %s176, 2
        %s178 = smul.addr %s177, 8
        %s179 = scalar_lea.vmem %s2, %s178
        %s180 = smul.u32 2, %s17
        %v181 = vld [vmem:[%s150] sm:$0xff]
        %v182 = vld [vmem:[%s150 + $0x8] sm:$0xff]
        %v183 = vld [vmem:[%s150 + $0x10] sm:$0xff]
        %v184 = vld [vmem:[%s150 + $0x18] sm:$0xff]
        %189 = vrot.lane.b32.xlu0 %v181, 126
        %v190 = vpop.permute.xlu0 %189
        %191 = vrot.lane.b32.xlu0 %v182, 126
        %v192 = vpop.permute.xlu0 %191
        %193 = vrot.lane.b32.xlu0 %v183, 126
        %v194 = vpop.permute.xlu0 %193
        %195 = vrot.lane.b32.xlu0 %v184, 126
        %v196 = vpop.permute.xlu0 %195
        %v201 = vadd.f32 %v181, %v190
        %v202 = vadd.f32 %v182, %v192
        %v203 = vadd.f32 %v183, %v194
        %v204 = vadd.f32 %v184, %v196
        %s205 = sld [smem:[#allocation2 + $0x3]]
        %v206 = vstv %s205
        %v207 = vmul.f32 %v206, %v201
        %v208 = vmul.f32 %v206, %v202
        %v209 = vmul.f32 %v206, %v203
        %v210 = vmul.f32 %v206, %v204
        %s211 = sld [smem:[#allocation2 + $0x4]]
        %v212 = vstv %s211
        %v213 = vmul.f32 %v212, %v181
        %v214 = vmul.f32 %v212, %v182
        %v215 = vmul.f32 %v212, %v183
        %v216 = vmul.f32 %v212, %v184
        %221 = vrot.lane.b32.xlu0 %v213, 127
        %v222 = vpop.permute.xlu0 %221
        %223 = vrot.lane.b32.xlu0 %v214, 127
        %v224 = vpop.permute.xlu0 %223
        %225 = vrot.lane.b32.xlu0 %v215, 127
        %v226 = vpop.permute.xlu0 %225
        %227 = vrot.lane.b32.xlu0 %v216, 127
        %v228 = vpop.permute.xlu0 %227
        %v233 = vadd.f32 %v207, %v222
        %v234 = vadd.f32 %v208, %v224
        %v235 = vadd.f32 %v209, %v226
        %v236 = vadd.f32 %v210, %v228
        %vm241 = vcmask 1045504
        %v242 = vrot.slane %v233, 2
        %v243 = vrot.slane %v234, 2
        %v244 = vsel %vm241, %v242, %v243
        %v245 = vrot.slane %v235, 2
        %v246 = vrot.slane %v236, 2
        %v247 = vsel %vm241, %v245, %v246
        %v252 = vadd.f32 %v233, %v244
        %v253 = vadd.f32 %v234, %v243
        %v254 = vadd.f32 %v235, %v247
        %v255 = vadd.f32 %v236, %v246
        %s256 = sld [smem:[#allocation2]]
        %v257 = vstv %s256
        %v258 = vmul.f32 %v257, %v252
        %v259 = vmul.f32 %v257, %v253
        %v260 = vmul.f32 %v257, %v254
        %v261 = vmul.f32 %v257, %v255
        %s262 = sld [smem:[#allocation2 + $0x1]]
        %v263 = vstv %s262
        %v264 = vmul.f32 %v263, %v233
        %v265 = vmul.f32 %v263, %v234
        %v266 = vmul.f32 %v263, %v235
        %v267 = vmul.f32 %v263, %v236
        %vm272 = vcmask 1046528
        %v273 = vrot.slane %v264, 1
        %v274 = vrot.slane %v265, 1
        %v275 = vsel %vm272, %v273, %v274
        %v276 = vrot.slane %v266, 1
        %v277 = vrot.slane %v267, 1
        %v278 = vsel %vm272, %v276, %v277
        %v283 = vadd.f32 %v258, %v275
        %v284 = vadd.f32 %v259, %v274
        %v285 = vadd.f32 %v260, %v278
        %v286 = vadd.f32 %v261, %v277
        %vm287 = vcmask 113664
        %288 = vst.msk [vmem:[%s179] sm:$0xff] %vm287, %v283
        %vm289 = vcmask 111616
        %290 = vst.msk [vmem:[%s179 + $0x8] sm:$0x3f] %vm289, %v284
        %291 = vst.msk [vmem:[%s179 + $0x10] sm:$0xff] %vm287, %v285
        %292 = vst.msk [vmem:[%s179 + $0x18] sm:$0x3f] %vm289, %v286
        %s293 = smul.u32 2, %s17
        %p294 = scmp.lt.s32.totalorder %s293, 7
        %s295 = scalar_select %p294, %s293, 7
        %s296 = smul.addr %s295, 2
        %s297 = smul.addr %s296, 8
        %s298 = scalar_lea.vmem %s2, %s297
        // Predicated region
        $region37: #{tpu_custom_call.1} parent=27 // pred_check
          %p299 = pneg %p82
        $region38: #{tpu_custom_call.1} parent=27 // pred_check_branch
          %301 = sbr.rel (%p299) target = $region40
        $region39: #{tpu_custom_call.1} parent=27 // pred_region
          %s302 = smul.u32 2, %s17
        $region40: #{tpu_custom_call.1} parent=27 // pred_fallthru
          _
      $region28: #{tpu_custom_call.1} parent=5 // pred_fallthru
        _
      %p303 = scmp.le.s32.totalorder 2, %s12
      // Predicated region
      $region41: #{tpu_custom_call.1} parent=5 // pred_check
        %p304 = pneg %p303
      $region42: #{tpu_custom_call.1} parent=5 // pred_check_branch
        %306 = sbr.rel (%p304) target = $region44
      $region43: #{tpu_custom_call.1} parent=5 // pred_region
        %s307 = ssub.s32 %s12, 2
        // Predicated region
        $region45: #{tpu_custom_call.1} parent=43 // pred_check
          %p308 = pneg %p88
        $region46: #{tpu_custom_call.1} parent=43 // pred_check_branch
          %310 = sbr.rel (%p308) target = $region48
        $region47: #{tpu_custom_call.1} parent=43 // pred_region
          %s311 = smul.u32 2, %s18
          %p312 = scmp.lt.s32.totalorder %s311, 7
          %s313 = scalar_select %p312, %s311, 7
          %s314 = smul.addr %s313, 2
          %s315 = smul.addr %s314, 8
          %s316 = scalar_lea.vmem %s2, %s315
        $region48: #{tpu_custom_call.1} parent=43 // pred_fallthru
          _
      $region44: #{tpu_custom_call.1} parent=5 // pred_fallthru
        _
    $region6: #{tpu_custom_call.1} parent=1 // loop_footer
      %s16 = sadd.s32 1, %s12
    $region7: #{tpu_custom_call.1} parent=1 // loop_footer_branch
      %11 = sbr.rel target = $region3
    $region8: #{tpu_custom_call.1} parent=1 // loop_exit
      _
    %317 = vsyncpa [#allocation3], 1
    %s318 = scalar_lea.sflag [#allocation3], 1
    %319 = vsyncpa %s318, 1
    %320 = vsyncpa [#allocation4], 1
    %s321 = scalar_lea.sflag [#allocation4], 1
    %322 = vsyncpa %s321, 1

</llo_original>
